<compile_context>
chip_gen: v6e
topology: v6e:2x2x1
jax: 0.10.0
libtpu: 0.0.40
codegen_flags: <defaults>
</compile_context>

<pallas_src>
from functools import partial

import jax
import jax.numpy as jnp
import numpy as np
from jax.experimental import pallas as pl
from jax.experimental.pallas import tpu as pltpu
from jax.scipy.linalg import block_diag


def _flow_kernel(depth, half, hidden, alpha,
                 x_ref, xc_ref, loc_ref, scale_ref,
                 w1x_ref, w1c_ref, b1_ref, wm_ref, bm_ref, wo_ref, bo_ref,
                 h_ref, ld_ref):
    f32 = jnp.float32
    bf16 = jnp.bfloat16
    twoH = 2 * hidden

    x = x_ref[...].astype(f32)                 # (TB, C)
    loc = loc_ref[...]                         # (1, C)
    scl = scale_ref[...]                       # (1, C)

    # --- ActNorm (H=W=1): h = scale * (x + loc); its logdet (param-only) is
    #     added in the wrapper.
    h = scl * (x + loc)

    # --- InvLeakyRelu forward (alpha), logdet contribution is 0
    h = h * jnp.where(h >= 0, f32(1.0), f32(alpha))

    # Fused conditioner weights (bf16) / biases (f32)
    w1x = w1x_ref[...]     # (2, half, 2H)        bf16
    w1c = w1c_ref[...]     # (Ccond, 4H)          bf16
    b1 = b1_ref[...]       # (2, 1, 2H)           f32
    wm = wm_ref[...]       # (2, depth, 2H, 2H)   bf16 (block-diag)
    bm = bm_ref[...]       # (2, depth, 1, 2H)    f32
    wo = wo_ref[...]       # (2, 2H, 2*half)      bf16 (block-diag)
    bo = bo_ref[...]       # (2, 1, 2*half)       f32

    # Shared conditioning contribution for BOTH fused pairs: one matmul.
    cond = jnp.dot(xc_ref[...].astype(bf16), w1c,
                   preferred_element_type=f32)            # (TB, 4H)

    def lrelu(a):
        return jnp.where(a >= 0, a, f32(0.01) * a)

    def fused_mlp(pair, x_half, cond_p):
        # First layer: split matmul (no lane concat), xc part precomputed.
        a = jnp.dot(x_half.astype(bf16), w1x[pair],
                    preferred_element_type=f32) + cond_p + b1[pair]
        a = lrelu(a)
        for d in range(depth):                             # static unroll
            a = jnp.dot(a.astype(bf16), wm[pair, d],
                        preferred_element_type=f32) + bm[pair, d]
            a = lrelu(a)
        st = jnp.dot(a.astype(bf16), wo[pair],
                     preferred_element_type=f32) + bo[pair]
        return st[:, :half], st[:, half:]                  # (s, t)

    # --- ConditionalDoubleVectorCouplingBlock (mode='normal')
    x0 = h[:, :half]
    x1 = h[:, half:]

    # coupling i = 0: conditioner input is [x0, xc]
    s0, t0 = fused_mlp(0, x0, cond[:, :twoH])
    x1 = x1 * jnp.exp(s0) + t0
    ld = jnp.sum(s0, axis=1, keepdims=True)

    # coupling i = 1 (halves swapped before split): conditioner input is [x1, xc]
    s1, t1 = fused_mlp(1, x1, cond[:, twoH:])
    x0 = x0 * jnp.exp(s1) + t1
    ld = ld + jnp.sum(s1, axis=1, keepdims=True)

    h_ref[...] = jnp.concatenate([x1, x0], axis=1)
    ld_ref[...] = ld


def flow_block_forward(x4, xc4, kp):
    """Forward pass. x4: (B, C, 1, 1), xc4: (B, Ccond, 1, 1).
    Returns (h, logdet) with h: (B, C), logdet: (B,), matching PyTorch."""
    B, C = x4.shape[0], x4.shape[1]
    Cc = xc4.shape[1]
    x = x4.reshape(B, C)
    xc = xc4.reshape(B, Cc)

    depth = kp["depth"]
    half = kp["half"]
    hidden = kp["b1"].shape[-1] // 2

    TB = B if B <= 512 else 512
    grid = (pl.cdiv(B, TB),)

    kernel = partial(_flow_kernel, depth, half, hidden, 0.9)

    def const_spec(arr):
        zeros = (0,) * arr.ndim
        return pl.BlockSpec(arr.shape, lambda i: zeros)

    in_specs = [
        pl.BlockSpec((TB, C), lambda i: (i, 0)),      # x
        pl.BlockSpec((TB, Cc), lambda i: (i, 0)),     # xc
        const_spec(kp["loc"]), const_spec(kp["scale"]),
        const_spec(kp["w1x"]), const_spec(kp["w1c"]), const_spec(kp["b1"]),
        const_spec(kp["wm"]), const_spec(kp["bm"]),
        const_spec(kp["wo"]), const_spec(kp["bo"]),
    ]
    out_specs = (pl.BlockSpec((TB, C), lambda i: (i, 0)),
                 pl.BlockSpec((TB, 1), lambda i: (i, 0)))

    h, ld = pl.pallas_call(
        kernel,
        out_shape=(jax.ShapeDtypeStruct((B, C), jnp.float32),
                   jax.ShapeDtypeStruct((B, 1), jnp.float32)),
        grid=grid,
        in_specs=in_specs,
        out_specs=out_specs,
        compiler_params=pltpu.CompilerParams(dimension_semantics=("parallel",)),
    )(x, xc,
      kp["loc"], kp["scale"],
      kp["w1x"], kp["w1c"], kp["b1"],
      kp["wm"], kp["bm"], kp["wo"], kp["bo"])

    # Shuffle: static permutation -> cheap column gather outside the kernel.
    h = h[:, kp["idx"]]
    # ActNorm logdet = sum(log|scale|) (H=W=1), precomputed from params.
    logdet = ld[:, 0] + kp["logabs_sum"]
    return h, logdet


def init_params(key, in_channels, cond_channels, hidden_dim, hidden_depth):
    """Raw (PyTorch-like, unfused, f32) parameters."""
    half = in_channels // 2
    dim = half + cond_channels   # mode='normal'
    ks = jax.random.split(key, 16)

    def linear(k, fan_in, fan_out):
        kw, kb = jax.random.split(k)
        bound = 1.0 / np.sqrt(fan_in)
        w = jax.random.uniform(kw, (fan_in, fan_out), jnp.float32, -bound, bound)
        b = jax.random.uniform(kb, (1, fan_out), jnp.float32, -bound, bound)
        return w, b

    w1, b1, wm, bm, wo, bo = [], [], [], [], [], []
    for n in range(4):                      # subnet order: s0, s1, t0, t1
        k_net = jax.random.split(ks[n], hidden_depth + 2)
        w, b = linear(k_net[0], dim, hidden_dim)
        w1.append(w); b1.append(b)
        wms, bms = [], []
        for d in range(hidden_depth):
            w, b = linear(k_net[1 + d], hidden_dim, hidden_dim)
            wms.append(w); bms.append(b)
        wm.append(jnp.stack(wms)); bm.append(jnp.stack(bms))
        w, b = linear(k_net[-1], hidden_dim, half)
        wo.append(w); bo.append(b)

    # ActNorm parameters (deterministic, non-trivial)
    loc = 0.1 * jax.random.normal(ks[8], (1, in_channels), jnp.float32)
    scale = jax.random.uniform(ks[9], (1, in_channels), jnp.float32, 0.5, 1.5)

    # Shuffle permutation: out[:, j] = x[:, idx[j]]
    idx = np.asarray(jax.random.permutation(ks[10], in_channels))

    return {
        "depth": hidden_depth,
        "loc": loc, "scale": scale,
        "w1": jnp.stack(w1), "b1": jnp.stack(b1),
        "wm": jnp.stack(wm), "bm": jnp.stack(bm),
        "wo": jnp.stack(wo), "bo": jnp.stack(bo),
        "idx": idx,
    }


def pack_params(p):
    """Fuse subnet pairs {s0,t0} and {s1,t1}, split off the xc part of the
    first layer, and cast matmul weights to bf16 (biases stay f32)."""
    depth = p["depth"]
    w1 = p["w1"]                      # (4, dim, H)
    half = p["wo"].shape[2]           # out_dim = in_channels // 2
    H = w1.shape[2]

    def pair(si, ti):
        w1x = jnp.concatenate([w1[si, :half], w1[ti, :half]], axis=1)   # (half, 2H)
        w1c = jnp.concatenate([w1[si, half:], w1[ti, half:]], axis=1)   # (Cc, 2H)
        b1 = jnp.concatenate([p["b1"][si], p["b1"][ti]], axis=1)        # (1, 2H)
        wm = jnp.stack([block_diag(p["wm"][si, d], p["wm"][ti, d])
                        for d in range(depth)])                          # (depth, 2H, 2H)
        bm = jnp.stack([jnp.concatenate([p["bm"][si, d], p["bm"][ti, d]], axis=1)
                        for d in range(depth)])                          # (depth, 1, 2H)
        wo = block_diag(p["wo"][si], p["wo"][ti])                        # (2H, 2*half)
        bo = jnp.concatenate([p["bo"][si], p["bo"][ti]], axis=1)         # (1, 2*half)
        return w1x, w1c, b1, wm, bm, wo, bo

    p0 = pair(0, 2)   # coupling 0: s0, t0
    p1 = pair(1, 3)   # coupling 1: s1, t1

    return {
        "depth": depth, "half": half,
        "loc": p["loc"], "scale": p["scale"],
        "logabs_sum": jnp.sum(jnp.log(jnp.abs(p["scale"]))).astype(jnp.float32),
        "w1x": jnp.stack([p0[0], p1[0]]).astype(jnp.bfloat16),          # (2, half, 2H)
        "w1c": jnp.concatenate([p0[1], p1[1]], axis=1).astype(jnp.bfloat16),  # (Cc, 4H)
        "b1": jnp.stack([p0[2], p1[2]]),                                # (2, 1, 2H)
        "wm": jnp.stack([p0[3], p1[3]]).astype(jnp.bfloat16),           # (2, depth, 2H, 2H)
        "bm": jnp.stack([p0[4], p1[4]]),                                # (2, depth, 1, 2H)
        "wo": jnp.stack([p0[5], p1[5]]).astype(jnp.bfloat16),           # (2, 2H, 2*half)
        "bo": jnp.stack([p0[6], p1[6]]),                                # (2, 1, 2*half)
        "idx": p["idx"],
    }


def reference_forward(x4, xc4, p):
    """Pure-JAX (f32, unfused) reference mirroring the PyTorch module."""
    x = x4.reshape(x4.shape[0], x4.shape[1]).astype(jnp.float32)
    xc = xc4.reshape(xc4.shape[0], xc4.shape[1]).astype(jnp.float32)
    h = p["scale"] * (x + p["loc"])
    ld = jnp.full((x.shape[0],), jnp.sum(jnp.log(jnp.abs(p["scale"]))), jnp.float32)
    h = h * jnp.where(h >= 0, 1.0, 0.9)
    half = x.shape[1] // 2

    def mlp(k, inp):
        a = inp @ p["w1"][k] + p["b1"][k]
        a = jnp.where(a >= 0, a, 0.01 * a)
        for d in range(p["depth"]):
            a = a @ p["wm"][k, d] + p["bm"][k, d]
            a = jnp.where(a >= 0, a, 0.01 * a)
        return a @ p["wo"][k] + p["bo"][k]

    x0, x1 = h[:, :half], h[:, half:]
    ci = jnp.concatenate([x0, xc], 1)
    s0 = mlp(0, ci)
    x1 = x1 * jnp.exp(s0) + mlp(2, ci)
    ld = ld + jnp.sum(s0, 1)
    ci = jnp.concatenate([x1, xc], 1)
    s1 = mlp(1, ci)
    x0 = x0 * jnp.exp(s1) + mlp(3, ci)
    ld = ld + jnp.sum(s1, 1)
    h = jnp.concatenate([x1, x0], 1)
    return h[:, p["idx"]], ld


if __name__ == "__main__":
    B = 8
    in_channels = 8
    cond_channels = 8
    hidden_dim = 32
    hidden_depth = 2

    root = jax.random.PRNGKey(0)
    k_x, k_c, k_p = jax.random.split(root, 3)
    x = jax.random.normal(k_x, (B, in_channels, 1, 1), jnp.float32)
    xcond = jax.random.normal(k_c, (B, cond_channels, 1, 1), jnp.float32)

    params = init_params(k_p, in_channels, cond_channels, hidden_dim, hidden_depth)
    kparams = pack_params(params)

    h, logdet = flow_block_forward(x, xcond, kparams)
    h = jax.block_until_ready(h)
    logdet = jax.block_until_ready(logdet)

    h_ref, ld_ref = reference_forward(x, xcond, params)
    assert np.all(np.isfinite(np.asarray(h))) and np.all(np.isfinite(np.asarray(logdet)))
    np.testing.assert_allclose(np.asarray(h), np.asarray(h_ref), rtol=5e-2, atol=5e-2)
    np.testing.assert_allclose(np.asarray(logdet), np.asarray(ld_ref), rtol=5e-2, atol=5e-2)

    print("KERNEL_OK")
</pallas_src>

<mosaic_0001>
module attributes {stable_mosaic.version = 11 : i64} {
  func.func @_flow_kernel(%arg0: i32, %arg1: memref<8x8xf32, #tpu.memory_space<vmem>>, %arg2: memref<8x8xf32, #tpu.memory_space<vmem>>, %arg3: memref<1x8xf32, #tpu.memory_space<vmem>>, %arg4: memref<1x8xf32, #tpu.memory_space<vmem>>, %arg5: memref<2x4x64xbf16, #tpu.memory_space<vmem>>, %arg6: memref<8x128xbf16, #tpu.memory_space<vmem>>, %arg7: memref<2x1x64xf32, #tpu.memory_space<vmem>>, %arg8: memref<2x2x64x64xbf16, #tpu.memory_space<vmem>>, %arg9: memref<2x2x1x64xf32, #tpu.memory_space<vmem>>, %arg10: memref<2x64x8xbf16, #tpu.memory_space<vmem>>, %arg11: memref<2x1x8xf32, #tpu.memory_space<vmem>>, %arg12: memref<8x8xf32, #tpu.memory_space<vmem>>, %arg13: memref<8x1xf32, #tpu.memory_space<vmem>>) attributes {dimension_semantics = [#tpu.dimension_semantics<parallel>], iteration_bounds = array<i64: 1>, scalar_prefetch = 0 : i64, scratch_operands = 0 : i64, tpu.core_type = #tpu.core_type<tc>, window_params = [{transform_indices = @transform_0, window_bounds = array<i64: 8, 8>}, {transform_indices = @transform_1, window_bounds = array<i64: 8, 8>}, {pipeline_mode = #tpu.pipeline_mode<synchronous>, transform_indices = @transform_2, window_bounds = array<i64: 1, 8>}, {pipeline_mode = #tpu.pipeline_mode<synchronous>, transform_indices = @transform_3, window_bounds = array<i64: 1, 8>}, {pipeline_mode = #tpu.pipeline_mode<synchronous>, transform_indices = @transform_4, window_bounds = array<i64: 2, 4, 64>}, {pipeline_mode = #tpu.pipeline_mode<synchronous>, transform_indices = @transform_5, window_bounds = array<i64: 8, 128>}, {pipeline_mode = #tpu.pipeline_mode<synchronous>, transform_indices = @transform_6, window_bounds = array<i64: 2, 1, 64>}, {pipeline_mode = #tpu.pipeline_mode<synchronous>, transform_indices = @transform_7, window_bounds = array<i64: 2, 2, 64, 64>}, {pipeline_mode = #tpu.pipeline_mode<synchronous>, transform_indices = @transform_8, window_bounds = array<i64: 2, 2, 1, 64>}, {pipeline_mode = #tpu.pipeline_mode<synchronous>, transform_indices = @transform_9, window_bounds = array<i64: 2, 64, 8>}, {pipeline_mode = #tpu.pipeline_mode<synchronous>, transform_indices = @transform_10, window_bounds = array<i64: 2, 1, 8>}, {transform_indices = @transform_11, window_bounds = array<i64: 8, 8>}, {transform_indices = @transform_12, window_bounds = array<i64: 8, 1>}]} {
    %c0 = arith.constant 0 : index
    %c0_0 = arith.constant 0 : index
    %0 = vector.load %arg1[%c0, %c0_0] : memref<8x8xf32, #tpu.memory_space<vmem>>, vector<8x8xf32>
    %c0_1 = arith.constant 0 : index
    %c0_2 = arith.constant 0 : index
    %1 = vector.load %arg3[%c0_1, %c0_2] : memref<1x8xf32, #tpu.memory_space<vmem>>, vector<1x8xf32>
    %c0_3 = arith.constant 0 : index
    %c0_4 = arith.constant 0 : index
    %2 = vector.load %arg4[%c0_3, %c0_4] : memref<1x8xf32, #tpu.memory_space<vmem>>, vector<1x8xf32>
    %3 = vector.broadcast %1 : vector<1x8xf32> to vector<8x8xf32>
    %4 = arith.addf %0, %3 : vector<8x8xf32>
    %5 = vector.broadcast %2 : vector<1x8xf32> to vector<8x8xf32>
    %6 = arith.mulf %5, %4 : vector<8x8xf32>
    %cst = arith.constant 0.000000e+00 : f32
    %7 = vector.broadcast %cst : f32 to vector<8x8xf32>
    %8 = arith.cmpf oge, %6, %7 : vector<8x8xf32>
    %cst_5 = arith.constant 1.000000e+00 : f32
    %cst_6 = arith.constant 0.899999976 : f32
    %9 = vector.broadcast %cst_5 : f32 to vector<8x8xf32>
    %10 = vector.broadcast %cst_6 : f32 to vector<8x8xf32>
    %11 = arith.select %8, %9, %10 : vector<8x8xi1>, vector<8x8xf32>
    %12 = arith.mulf %6, %11 : vector<8x8xf32>
    %c0_7 = arith.constant 0 : index
    %c0_8 = arith.constant 0 : index
    %c0_9 = arith.constant 0 : index
    %13 = vector.load %arg5[%c0_7, %c0_8, %c0_9] : memref<2x4x64xbf16, #tpu.memory_space<vmem>>, vector<2x4x64xbf16>
    %c0_10 = arith.constant 0 : index
    %c0_11 = arith.constant 0 : index
    %14 = vector.load %arg6[%c0_10, %c0_11] : memref<8x128xbf16, #tpu.memory_space<vmem>>, vector<8x128xbf16>
    %c0_12 = arith.constant 0 : index
    %c0_13 = arith.constant 0 : index
    %c0_14 = arith.constant 0 : index
    %15 = vector.load %arg7[%c0_12, %c0_13, %c0_14] : memref<2x1x64xf32, #tpu.memory_space<vmem>>, vector<2x1x64xf32>
    %c0_15 = arith.constant 0 : index
    %c0_16 = arith.constant 0 : index
    %c0_17 = arith.constant 0 : index
    %c0_18 = arith.constant 0 : index
    %16 = vector.load %arg8[%c0_15, %c0_16, %c0_17, %c0_18] : memref<2x2x64x64xbf16, #tpu.memory_space<vmem>>, vector<2x2x64x64xbf16>
    %c0_19 = arith.constant 0 : index
    %c0_20 = arith.constant 0 : index
    %c0_21 = arith.constant 0 : index
    %c0_22 = arith.constant 0 : index
    %17 = vector.load %arg9[%c0_19, %c0_20, %c0_21, %c0_22] : memref<2x2x1x64xf32, #tpu.memory_space<vmem>>, vector<2x2x1x64xf32>
    %c0_23 = arith.constant 0 : index
    %c0_24 = arith.constant 0 : index
    %c0_25 = arith.constant 0 : index
    %18 = vector.load %arg10[%c0_23, %c0_24, %c0_25] : memref<2x64x8xbf16, #tpu.memory_space<vmem>>, vector<2x64x8xbf16>
    %c0_26 = arith.constant 0 : index
    %c0_27 = arith.constant 0 : index
    %c0_28 = arith.constant 0 : index
    %19 = vector.load %arg11[%c0_26, %c0_27, %c0_28] : memref<2x1x8xf32, #tpu.memory_space<vmem>>, vector<2x1x8xf32>
    %c0_29 = arith.constant 0 : index
    %c0_30 = arith.constant 0 : index
    %20 = vector.load %arg2[%c0_29, %c0_30] : memref<8x8xf32, #tpu.memory_space<vmem>>, vector<8x8xf32>
    %21 = arith.truncf %20 : vector<8x8xf32> to vector<8x8xbf16>
    %cst_31 = arith.constant dense<0.000000e+00> : vector<8x128xf32>
    %22 = tpu.matmul %21, %14, %cst_31 {dimension_numbers = #tpu.dot_dimension_numbers<[1], [0], [0], [1], [0, 0, 1, 1], [], []>} : vector<8x8xbf16>, vector<8x128xbf16>, vector<8x128xf32> -> vector<8x128xf32>
    %23 = vector.extract_strided_slice %12 {offsets = [0, 0], sizes = [8, 4], strides = [1, 1]} : vector<8x8xf32> to vector<8x4xf32>
    %24 = vector.extract_strided_slice %12 {offsets = [0, 4], sizes = [8, 4], strides = [1, 1]} : vector<8x8xf32> to vector<8x4xf32>
    %25 = vector.extract_strided_slice %22 {offsets = [0, 0], sizes = [8, 64], strides = [1, 1]} : vector<8x128xf32> to vector<8x64xf32>
    %26 = arith.truncf %23 : vector<8x4xf32> to vector<8x4xbf16>
    %27 = vector.extract_strided_slice %13 {offsets = [0, 0, 0], sizes = [1, 4, 64], strides = [1, 1, 1]} : vector<2x4x64xbf16> to vector<1x4x64xbf16>
    %28 = vector.shape_cast %27 : vector<1x4x64xbf16> to vector<4x64xbf16>
    %cst_32 = arith.constant dense<0.000000e+00> : vector<8x64xf32>
    %29 = tpu.matmul %26, %28, %cst_32 {dimension_numbers = #tpu.dot_dimension_numbers<[1], [0], [0], [1], [0, 0, 1, 1], [], []>} : vector<8x4xbf16>, vector<4x64xbf16>, vector<8x64xf32> -> vector<8x64xf32>
    %30 = arith.addf %29, %25 : vector<8x64xf32>
    %31 = vector.extract_strided_slice %15 {offsets = [0, 0, 0], sizes = [1, 1, 64], strides = [1, 1, 1]} : vector<2x1x64xf32> to vector<1x1x64xf32>
    %32 = vector.shape_cast %31 : vector<1x1x64xf32> to vector<1x64xf32>
    %33 = vector.broadcast %32 : vector<1x64xf32> to vector<8x64xf32>
    %34 = arith.addf %30, %33 : vector<8x64xf32>
    %cst_33 = arith.constant 0.000000e+00 : f32
    %35 = vector.broadcast %cst_33 : f32 to vector<8x64xf32>
    %36 = arith.cmpf oge, %34, %35 : vector<8x64xf32>
    %cst_34 = arith.constant 0.00999999977 : f32
    %37 = vector.broadcast %cst_34 : f32 to vector<8x64xf32>
    %38 = arith.mulf %37, %34 : vector<8x64xf32>
    %39 = arith.select %36, %34, %38 : vector<8x64xi1>, vector<8x64xf32>
    %40 = arith.truncf %39 : vector<8x64xf32> to vector<8x64xbf16>
    %41 = vector.extract_strided_slice %16 {offsets = [0, 0, 0, 0], sizes = [1, 1, 64, 64], strides = [1, 1, 1, 1]} : vector<2x2x64x64xbf16> to vector<1x1x64x64xbf16>
    %42 = vector.shape_cast %41 : vector<1x1x64x64xbf16> to vector<64x64xbf16>
    %cst_35 = arith.constant dense<0.000000e+00> : vector<8x64xf32>
    %43 = tpu.matmul %40, %42, %cst_35 {dimension_numbers = #tpu.dot_dimension_numbers<[1], [0], [0], [1], [0, 0, 1, 1], [], []>} : vector<8x64xbf16>, vector<64x64xbf16>, vector<8x64xf32> -> vector<8x64xf32>
    %44 = vector.extract_strided_slice %17 {offsets = [0, 0, 0, 0], sizes = [1, 1, 1, 64], strides = [1, 1, 1, 1]} : vector<2x2x1x64xf32> to vector<1x1x1x64xf32>
    %45 = vector.shape_cast %44 : vector<1x1x1x64xf32> to vector<1x64xf32>
    %46 = vector.broadcast %45 : vector<1x64xf32> to vector<8x64xf32>
    %47 = arith.addf %43, %46 : vector<8x64xf32>
    %cst_36 = arith.constant 0.000000e+00 : f32
    %48 = vector.broadcast %cst_36 : f32 to vector<8x64xf32>
    %49 = arith.cmpf oge, %47, %48 : vector<8x64xf32>
    %cst_37 = arith.constant 0.00999999977 : f32
    %50 = vector.broadcast %cst_37 : f32 to vector<8x64xf32>
    %51 = arith.mulf %50, %47 : vector<8x64xf32>
    %52 = arith.select %49, %47, %51 : vector<8x64xi1>, vector<8x64xf32>
    %53 = arith.truncf %52 : vector<8x64xf32> to vector<8x64xbf16>
    %54 = vector.extract_strided_slice %16 {offsets = [0, 1, 0, 0], sizes = [1, 1, 64, 64], strides = [1, 1, 1, 1]} : vector<2x2x64x64xbf16> to vector<1x1x64x64xbf16>
    %55 = vector.shape_cast %54 : vector<1x1x64x64xbf16> to vector<64x64xbf16>
    %cst_38 = arith.constant dense<0.000000e+00> : vector<8x64xf32>
    %56 = tpu.matmul %53, %55, %cst_38 {dimension_numbers = #tpu.dot_dimension_numbers<[1], [0], [0], [1], [0, 0, 1, 1], [], []>} : vector<8x64xbf16>, vector<64x64xbf16>, vector<8x64xf32> -> vector<8x64xf32>
    %57 = vector.extract_strided_slice %17 {offsets = [0, 1, 0, 0], sizes = [1, 1, 1, 64], strides = [1, 1, 1, 1]} : vector<2x2x1x64xf32> to vector<1x1x1x64xf32>
    %58 = vector.shape_cast %57 : vector<1x1x1x64xf32> to vector<1x64xf32>
    %59 = vector.broadcast %58 : vector<1x64xf32> to vector<8x64xf32>
    %60 = arith.addf %56, %59 : vector<8x64xf32>
    %cst_39 = arith.constant 0.000000e+00 : f32
    %61 = vector.broadcast %cst_39 : f32 to vector<8x64xf32>
    %62 = arith.cmpf oge, %60, %61 : vector<8x64xf32>
    %cst_40 = arith.constant 0.00999999977 : f32
    %63 = vector.broadcast %cst_40 : f32 to vector<8x64xf32>
    %64 = arith.mulf %63, %60 : vector<8x64xf32>
    %65 = arith.select %62, %60, %64 : vector<8x64xi1>, vector<8x64xf32>
    %66 = arith.truncf %65 : vector<8x64xf32> to vector<8x64xbf16>
    %67 = vector.extract_strided_slice %18 {offsets = [0, 0, 0], sizes = [1, 64, 8], strides = [1, 1, 1]} : vector<2x64x8xbf16> to vector<1x64x8xbf16>
    %68 = vector.shape_cast %67 : vector<1x64x8xbf16> to vector<64x8xbf16>
    %cst_41 = arith.constant dense<0.000000e+00> : vector<8x8xf32>
    %69 = tpu.matmul %66, %68, %cst_41 {dimension_numbers = #tpu.dot_dimension_numbers<[1], [0], [0], [1], [0, 0, 1, 1], [], []>} : vector<8x64xbf16>, vector<64x8xbf16>, vector<8x8xf32> -> vector<8x8xf32>
    %70 = vector.extract_strided_slice %19 {offsets = [0, 0, 0], sizes = [1, 1, 8], strides = [1, 1, 1]} : vector<2x1x8xf32> to vector<1x1x8xf32>
    %71 = vector.shape_cast %70 : vector<1x1x8xf32> to vector<1x8xf32>
    %72 = vector.broadcast %71 : vector<1x8xf32> to vector<8x8xf32>
    %73 = arith.addf %69, %72 : vector<8x8xf32>
    %74 = vector.extract_strided_slice %73 {offsets = [0, 0], sizes = [8, 4], strides = [1, 1]} : vector<8x8xf32> to vector<8x4xf32>
    %75 = vector.extract_strided_slice %73 {offsets = [0, 4], sizes = [8, 4], strides = [1, 1]} : vector<8x8xf32> to vector<8x4xf32>
    %76 = math.exp %74 : vector<8x4xf32>
    %77 = arith.mulf %24, %76 : vector<8x4xf32>
    %78 = arith.addf %77, %75 : vector<8x4xf32>
    %cst_42 = arith.constant dense<0.000000e+00> : vector<8xf32>
    %79 = vector.multi_reduction <add>, %74, %cst_42 [1] : vector<8x4xf32> to vector<8xf32>
    %80 = vector.shape_cast %79 : vector<8xf32> to vector<8x1xf32>
    %81 = vector.extract_strided_slice %22 {offsets = [0, 64], sizes = [8, 64], strides = [1, 1]} : vector<8x128xf32> to vector<8x64xf32>
    %82 = arith.truncf %78 : vector<8x4xf32> to vector<8x4xbf16>
    %83 = vector.extract_strided_slice %13 {offsets = [1, 0, 0], sizes = [1, 4, 64], strides = [1, 1, 1]} : vector<2x4x64xbf16> to vector<1x4x64xbf16>
    %84 = vector.shape_cast %83 : vector<1x4x64xbf16> to vector<4x64xbf16>
    %cst_43 = arith.constant dense<0.000000e+00> : vector<8x64xf32>
    %85 = tpu.matmul %82, %84, %cst_43 {dimension_numbers = #tpu.dot_dimension_numbers<[1], [0], [0], [1], [0, 0, 1, 1], [], []>} : vector<8x4xbf16>, vector<4x64xbf16>, vector<8x64xf32> -> vector<8x64xf32>
    %86 = arith.addf %85, %81 : vector<8x64xf32>
    %87 = vector.extract_strided_slice %15 {offsets = [1, 0, 0], sizes = [1, 1, 64], strides = [1, 1, 1]} : vector<2x1x64xf32> to vector<1x1x64xf32>
    %88 = vector.shape_cast %87 : vector<1x1x64xf32> to vector<1x64xf32>
    %89 = vector.broadcast %88 : vector<1x64xf32> to vector<8x64xf32>
    %90 = arith.addf %86, %89 : vector<8x64xf32>
    %cst_44 = arith.constant 0.000000e+00 : f32
    %91 = vector.broadcast %cst_44 : f32 to vector<8x64xf32>
    %92 = arith.cmpf oge, %90, %91 : vector<8x64xf32>
    %cst_45 = arith.constant 0.00999999977 : f32
    %93 = vector.broadcast %cst_45 : f32 to vector<8x64xf32>
    %94 = arith.mulf %93, %90 : vector<8x64xf32>
    %95 = arith.select %92, %90, %94 : vector<8x64xi1>, vector<8x64xf32>
    %96 = arith.truncf %95 : vector<8x64xf32> to vector<8x64xbf16>
    %97 = vector.extract_strided_slice %16 {offsets = [1, 0, 0, 0], sizes = [1, 1, 64, 64], strides = [1, 1, 1, 1]} : vector<2x2x64x64xbf16> to vector<1x1x64x64xbf16>
    %98 = vector.shape_cast %97 : vector<1x1x64x64xbf16> to vector<64x64xbf16>
    %cst_46 = arith.constant dense<0.000000e+00> : vector<8x64xf32>
    %99 = tpu.matmul %96, %98, %cst_46 {dimension_numbers = #tpu.dot_dimension_numbers<[1], [0], [0], [1], [0, 0, 1, 1], [], []>} : vector<8x64xbf16>, vector<64x64xbf16>, vector<8x64xf32> -> vector<8x64xf32>
    %100 = vector.extract_strided_slice %17 {offsets = [1, 0, 0, 0], sizes = [1, 1, 1, 64], strides = [1, 1, 1, 1]} : vector<2x2x1x64xf32> to vector<1x1x1x64xf32>
    %101 = vector.shape_cast %100 : vector<1x1x1x64xf32> to vector<1x64xf32>
    %102 = vector.broadcast %101 : vector<1x64xf32> to vector<8x64xf32>
    %103 = arith.addf %99, %102 : vector<8x64xf32>
    %cst_47 = arith.constant 0.000000e+00 : f32
    %104 = vector.broadcast %cst_47 : f32 to vector<8x64xf32>
    %105 = arith.cmpf oge, %103, %104 : vector<8x64xf32>
    %cst_48 = arith.constant 0.00999999977 : f32
    %106 = vector.broadcast %cst_48 : f32 to vector<8x64xf32>
    %107 = arith.mulf %106, %103 : vector<8x64xf32>
    %108 = arith.select %105, %103, %107 : vector<8x64xi1>, vector<8x64xf32>
    %109 = arith.truncf %108 : vector<8x64xf32> to vector<8x64xbf16>
    %110 = vector.extract_strided_slice %16 {offsets = [1, 1, 0, 0], sizes = [1, 1, 64, 64], strides = [1, 1, 1, 1]} : vector<2x2x64x64xbf16> to vector<1x1x64x64xbf16>
    %111 = vector.shape_cast %110 : vector<1x1x64x64xbf16> to vector<64x64xbf16>
    %cst_49 = arith.constant dense<0.000000e+00> : vector<8x64xf32>
    %112 = tpu.matmul %109, %111, %cst_49 {dimension_numbers = #tpu.dot_dimension_numbers<[1], [0], [0], [1], [0, 0, 1, 1], [], []>} : vector<8x64xbf16>, vector<64x64xbf16>, vector<8x64xf32> -> vector<8x64xf32>
    %113 = vector.extract_strided_slice %17 {offsets = [1, 1, 0, 0], sizes = [1, 1, 1, 64], strides = [1, 1, 1, 1]} : vector<2x2x1x64xf32> to vector<1x1x1x64xf32>
    %114 = vector.shape_cast %113 : vector<1x1x1x64xf32> to vector<1x64xf32>
    %115 = vector.broadcast %114 : vector<1x64xf32> to vector<8x64xf32>
    %116 = arith.addf %112, %115 : vector<8x64xf32>
    %cst_50 = arith.constant 0.000000e+00 : f32
    %117 = vector.broadcast %cst_50 : f32 to vector<8x64xf32>
    %118 = arith.cmpf oge, %116, %117 : vector<8x64xf32>
    %cst_51 = arith.constant 0.00999999977 : f32
    %119 = vector.broadcast %cst_51 : f32 to vector<8x64xf32>
    %120 = arith.mulf %119, %116 : vector<8x64xf32>
    %121 = arith.select %118, %116, %120 : vector<8x64xi1>, vector<8x64xf32>
    %122 = arith.truncf %121 : vector<8x64xf32> to vector<8x64xbf16>
    %123 = vector.extract_strided_slice %18 {offsets = [1, 0, 0], sizes = [1, 64, 8], strides = [1, 1, 1]} : vector<2x64x8xbf16> to vector<1x64x8xbf16>
    %124 = vector.shape_cast %123 : vector<1x64x8xbf16> to vector<64x8xbf16>
    %cst_52 = arith.constant dense<0.000000e+00> : vector<8x8xf32>
    %125 = tpu.matmul %122, %124, %cst_52 {dimension_numbers = #tpu.dot_dimension_numbers<[1], [0], [0], [1], [0, 0, 1, 1], [], []>} : vector<8x64xbf16>, vector<64x8xbf16>, vector<8x8xf32> -> vector<8x8xf32>
    %126 = vector.extract_strided_slice %19 {offsets = [1, 0, 0], sizes = [1, 1, 8], strides = [1, 1, 1]} : vector<2x1x8xf32> to vector<1x1x8xf32>
    %127 = vector.shape_cast %126 : vector<1x1x8xf32> to vector<1x8xf32>
    %128 = vector.broadcast %127 : vector<1x8xf32> to vector<8x8xf32>
    %129 = arith.addf %125, %128 : vector<8x8xf32>
    %130 = vector.extract_strided_slice %129 {offsets = [0, 0], sizes = [8, 4], strides = [1, 1]} : vector<8x8xf32> to vector<8x4xf32>
    %131 = vector.extract_strided_slice %129 {offsets = [0, 4], sizes = [8, 4], strides = [1, 1]} : vector<8x8xf32> to vector<8x4xf32>
    %132 = math.exp %130 : vector<8x4xf32>
    %133 = arith.mulf %23, %132 : vector<8x4xf32>
    %134 = arith.addf %133, %131 : vector<8x4xf32>
    %cst_53 = arith.constant dense<0.000000e+00> : vector<8xf32>
    %135 = vector.multi_reduction <add>, %130, %cst_53 [1] : vector<8x4xf32> to vector<8xf32>
    %136 = vector.shape_cast %135 : vector<8xf32> to vector<8x1xf32>
    %137 = arith.addf %80, %136 : vector<8x1xf32>
    %138 = tpu.concatenate %78, %134 in 1 : vector<8x4xf32>, vector<8x4xf32> -> vector<8x8xf32>
    %c0_54 = arith.constant 0 : index
    %c0_55 = arith.constant 0 : index
    %139 = vector.load %arg12[%c0_54, %c0_55] : memref<8x8xf32, #tpu.memory_space<vmem>>, vector<8x8xf32>
    tpu.vector_store %arg12[%c0_54, %c0_55], %138 {strides = array<i32>} : memref<8x8xf32, #tpu.memory_space<vmem>>, vector<8x8xf32>,
    %c0_56 = arith.constant 0 : index
    %c0_57 = arith.constant 0 : index
    %140 = vector.load %arg13[%c0_56, %c0_57] : memref<8x1xf32, #tpu.memory_space<vmem>>, vector<8x1xf32>
    tpu.vector_store %arg13[%c0_56, %c0_57], %137 {strides = array<i32>} : memref<8x1xf32, #tpu.memory_space<vmem>>, vector<8x1xf32>,
    return
  }
  func.func @transform_0(%arg0: i32) -> (i32, i32) {
    %c0_i32 = arith.constant 0 : i32
    %c0_i32_0 = arith.constant 0 : i32
    return %arg0, %c0_i32 : i32, i32
  }
  func.func @transform_1(%arg0: i32) -> (i32, i32) {
    %c0_i32 = arith.constant 0 : i32
    %c0_i32_0 = arith.constant 0 : i32
    return %arg0, %c0_i32 : i32, i32
  }
  func.func @transform_2(%arg0: i32) -> (i32, i32) {
    %c0_i32 = arith.constant 0 : i32
    %c0_i32_0 = arith.constant 0 : i32
    %c0_i32_1 = arith.constant 0 : i32
    return %c0_i32, %c0_i32_0 : i32, i32
  }
  func.func @transform_3(%arg0: i32) -> (i32, i32) {
    %c0_i32 = arith.constant 0 : i32
    %c0_i32_0 = arith.constant 0 : i32
    %c0_i32_1 = arith.constant 0 : i32
    return %c0_i32, %c0_i32_0 : i32, i32
  }
  func.func @transform_4(%arg0: i32) -> (i32, i32, i32) {
    %c0_i32 = arith.constant 0 : i32
    %c0_i32_0 = arith.constant 0 : i32
    %c0_i32_1 = arith.constant 0 : i32
    %c0_i32_2 = arith.constant 0 : i32
    return %c0_i32, %c0_i32_0, %c0_i32_1 : i32, i32, i32
  }
  func.func @transform_5(%arg0: i32) -> (i32, i32) {
    %c0_i32 = arith.constant 0 : i32
    %c0_i32_0 = arith.constant 0 : i32
    %c0_i32_1 = arith.constant 0 : i32
    return %c0_i32, %c0_i32_0 : i32, i32
  }
  func.func @transform_6(%arg0: i32) -> (i32, i32, i32) {
    %c0_i32 = arith.constant 0 : i32
    %c0_i32_0 = arith.constant 0 : i32
    %c0_i32_1 = arith.constant 0 : i32
    %c0_i32_2 = arith.constant 0 : i32
    return %c0_i32, %c0_i32_0, %c0_i32_1 : i32, i32, i32
  }
  func.func @transform_7(%arg0: i32) -> (i32, i32, i32, i32) {
    %c0_i32 = arith.constant 0 : i32
    %c0_i32_0 = arith.constant 0 : i32
    %c0_i32_1 = arith.constant 0 : i32
    %c0_i32_2 = arith.constant 0 : i32
    %c0_i32_3 = arith.constant 0 : i32
    return %c0_i32, %c0_i32_0, %c0_i32_1, %c0_i32_2 : i32, i32, i32, i32
  }
  func.func @transform_8(%arg0: i32) -> (i32, i32, i32, i32) {
    %c0_i32 = arith.constant 0 : i32
    %c0_i32_0 = arith.constant 0 : i32
    %c0_i32_1 = arith.constant 0 : i32
    %c0_i32_2 = arith.constant 0 : i32
    %c0_i32_3 = arith.constant 0 : i32
    return %c0_i32, %c0_i32_0, %c0_i32_1, %c0_i32_2 : i32, i32, i32, i32
  }
  func.func @transform_9(%arg0: i32) -> (i32, i32, i32) {
    %c0_i32 = arith.constant 0 : i32
    %c0_i32_0 = arith.constant 0 : i32
    %c0_i32_1 = arith.constant 0 : i32
    %c0_i32_2 = arith.constant 0 : i32
    return %c0_i32, %c0_i32_0, %c0_i32_1 : i32, i32, i32
  }
  func.func @transform_10(%arg0: i32) -> (i32, i32, i32) {
    %c0_i32 = arith.constant 0 : i32
    %c0_i32_0 = arith.constant 0 : i32
    %c0_i32_1 = arith.constant 0 : i32
    %c0_i32_2 = arith.constant 0 : i32
    return %c0_i32, %c0_i32_0, %c0_i32_1 : i32, i32, i32
  }
  func.func @transform_11(%arg0: i32) -> (i32, i32) {
    %c0_i32 = arith.constant 0 : i32
    %c0_i32_0 = arith.constant 0 : i32
    return %arg0, %c0_i32 : i32, i32
  }
  func.func @transform_12(%arg0: i32) -> (i32, i32) {
    %c0_i32 = arith.constant 0 : i32
    %c0_i32_0 = arith.constant 0 : i32
    return %arg0, %c0_i32 : i32, i32
  }
}

</mosaic_0001>

<llo_original>
// kernel: tpu_custom_call.1
$region0: #{tpu_custom_call.1}
  #allocation0 [shape = 'u32[]', space=smem, size = 0x4, offset = 0x4, fixed_abs, tag = 'smem constant byte address 0x4 - core index']
  #allocation1 [shape = 'u32[144,128]{1,0:T(1,128)}', space=vmem, size = 0x12000, scoped, tag = 'internal scratch']
  %s0 = inlined_call_operand.vmem [shape: f32[8,8], index: 0, kind: input, shape index: {}]
  %s1 = inlined_call_operand.vmem [shape: f32[8,8], index: 1, kind: input, shape index: {}]
  %s2 = inlined_call_operand.vmem [shape: f32[1,8], index: 2, kind: input, shape index: {}]
  %s3 = inlined_call_operand.vmem [shape: f32[1,8], index: 3, kind: input, shape index: {}]
  %s4 = inlined_call_operand.vmem [shape: bf16[2,4,64], index: 4, kind: input, shape index: {}]
  %s5 = inlined_call_operand.vmem [shape: bf16[8,128], index: 5, kind: input, shape index: {}]
  %s6 = inlined_call_operand.vmem [shape: f32[2,1,64], index: 6, kind: input, shape index: {}]
  %s7 = inlined_call_operand.hbm [shape: bf16[2,2,64,64], index: 7, kind: input, shape index: {}]
  %s8 = inlined_call_operand.vmem [shape: f32[2,2,1,64], index: 8, kind: input, shape index: {}]
  %s9 = inlined_call_operand.vmem [shape: bf16[2,64,8], index: 9, kind: input, shape index: {}]
  %s10 = inlined_call_operand.vmem [shape: f32[2,1,8], index: 10, kind: input, shape index: {}]
  %s11 = inlined_call_operand.hbm [shape: f32[8,8], index: 11, kind: output, shape index: {0}]
  %s12 = inlined_call_operand.vmem [shape: f32[8,1], index: 12, kind: output, shape index: {1}]
  %13 = xla_tuple %s11, %s12
  %s14 = sld [smem:[#allocation0]]
  $region66: #{tpu_custom_call.1} parent=0
    _
  %s16 = ssub.s32 1, %s14
  %s17 = scalar_select 0, %s16, %s14
  $region1: #{tpu_custom_call.1} parent=0
    #allocation2 [shape = 'u8[65536]{0}', space=vmem, size = 0x10000, scoped, tag = 'input window, operand 7, single buffered']
    #allocation3 [shape = 's32[1]{0}', space=sflag, size = 0x4, scoped, tag = 'scoped memory for tpu_custom_call.1']
    #allocation4 [shape = 's32[1]{0}', space=sflag, size = 0x4, scoped, tag = 'scoped memory for tpu_custom_call.1']
    #allocation5 [shape = 'u8[4096]{0}', space=vmem, size = 0x1000, scoped, tag = 'output window, operand 0, single buffered']
    %18 = vsyncpa [#allocation3], 0
    %19 = vsyncpa [#allocation4], 0
    // Predicated region
    $region2: #{tpu_custom_call.1} parent=1 // pred_check
      _
    $region3: #{tpu_custom_call.1} parent=1 // pred_check_branch
      %21 = sbr.rel (0) target = $region5
    $region4: #{tpu_custom_call.1} parent=1 // pred_region
      _
    $region5: #{tpu_custom_call.1} parent=1 // pred_fallthru
      _
    // Predicated region
    $region6: #{tpu_custom_call.1} parent=1 // pred_check
      _
    $region7: #{tpu_custom_call.1} parent=1 // pred_check_branch
      %23 = sbr.rel (0) target = $region9
    $region8: #{tpu_custom_call.1} parent=1 // pred_region
      _
    $region9: #{tpu_custom_call.1} parent=1 // pred_fallthru
      _
    // Predicated region
    $region10: #{tpu_custom_call.1} parent=1 // pred_check
      _
    $region11: #{tpu_custom_call.1} parent=1 // pred_check_branch
      %25 = sbr.rel (0) target = $region13
    $region12: #{tpu_custom_call.1} parent=1 // pred_region
      _
    $region13: #{tpu_custom_call.1} parent=1 // pred_fallthru
      _
    // Predicated region
    $region14: #{tpu_custom_call.1} parent=1 // pred_check
      _
    $region15: #{tpu_custom_call.1} parent=1 // pred_check_branch
      %27 = sbr.rel (0) target = $region17
    $region16: #{tpu_custom_call.1} parent=1 // pred_region
      _
    $region17: #{tpu_custom_call.1} parent=1 // pred_fallthru
      _
    // Predicated region
    $region18: #{tpu_custom_call.1} parent=1 // pred_check
      _
    $region19: #{tpu_custom_call.1} parent=1 // pred_check_branch
      %29 = sbr.rel (0) target = $region21
    $region20: #{tpu_custom_call.1} parent=1 // pred_region
      _
    $region21: #{tpu_custom_call.1} parent=1 // pred_fallthru
      _
    // Predicated region
    $region22: #{tpu_custom_call.1} parent=1 // pred_check
      _
    $region23: #{tpu_custom_call.1} parent=1 // pred_check_branch
      %31 = sbr.rel (0) target = $region25
    $region24: #{tpu_custom_call.1} parent=1 // pred_region
      _
    $region25: #{tpu_custom_call.1} parent=1 // pred_fallthru
      _
    // Predicated region
    $region26: #{tpu_custom_call.1} parent=1 // pred_check
      _
    $region27: #{tpu_custom_call.1} parent=1 // pred_check_branch
      %33 = sbr.rel (0) target = $region29
    $region28: #{tpu_custom_call.1} parent=1 // pred_region
      _
    $region29: #{tpu_custom_call.1} parent=1 // pred_fallthru
      _
    // Predicated region
    $region30: #{tpu_custom_call.1} parent=1 // pred_check
      _
    $region31: #{tpu_custom_call.1} parent=1 // pred_check_branch
      %35 = sbr.rel (0) target = $region33
    $region32: #{tpu_custom_call.1} parent=1 // pred_region
      %s37 = ssub.s32 2048, 2048
      %38 = vsyncadd [#allocation3], %s37
      %s39 = sshll.u32 [#allocation2], 4
      %s40 = int_to_ptr.vmem [resolvable:$true] %s39
      %45 = dma.hbm_to_vmem [thread:$0]  %s7, 2048, %s40, [#allocation3], 64, 64, 4
    $region33: #{tpu_custom_call.1} parent=1 // pred_fallthru
      _
    // Predicated region
    $region34: #{tpu_custom_call.1} parent=1 // pred_check
      _
    $region35: #{tpu_custom_call.1} parent=1 // pred_check_branch
      %47 = sbr.rel (0) target = $region37
    $region36: #{tpu_custom_call.1} parent=1 // pred_region
      _
    $region37: #{tpu_custom_call.1} parent=1 // pred_fallthru
      _
    // Predicated region
    $region38: #{tpu_custom_call.1} parent=1 // pred_check
      _
    $region39: #{tpu_custom_call.1} parent=1 // pred_check_branch
      %49 = sbr.rel (0) target = $region41
    $region40: #{tpu_custom_call.1} parent=1 // pred_region
      _
    $region41: #{tpu_custom_call.1} parent=1 // pred_fallthru
      _
    // Predicated region
    $region42: #{tpu_custom_call.1} parent=1 // pred_check
      _
    $region43: #{tpu_custom_call.1} parent=1 // pred_check_branch
      %51 = sbr.rel (0) target = $region45
    $region44: #{tpu_custom_call.1} parent=1 // pred_region
      _
    $region45: #{tpu_custom_call.1} parent=1 // pred_fallthru
      _
    // Predicated region
    $region46: #{tpu_custom_call.1} parent=1 // pred_check
      _
    $region47: #{tpu_custom_call.1} parent=1 // pred_check_branch
      %53 = sbr.rel (0) target = $region49
    $region48: #{tpu_custom_call.1} parent=1 // pred_region
      %54 = dma.done [#allocation3], 2048
    $region49: #{tpu_custom_call.1} parent=1 // pred_fallthru
      _
    %v56 = vld [vmem:[%s0] sm:$0xff]
    %v57 = vld [vmem:[%s2] sm:$0x1]
    %v58 = vld [vmem:[%s3] sm:$0x1]
    %v60 = vlaneseq
    %v61 = vshrl.u32 %v60, 7
    %v62 = vsub.s32 0, %v61
    %v63 = vrot.slane %v57, %v62
    %v65 = vadd.f32 %v56, %v63
    %v67 = vlaneseq
    %v68 = vshrl.u32 %v67, 7
    %v69 = vsub.s32 0, %v68
    %v70 = vrot.slane %v58, %v69
    %v72 = vmul.f32 %v70, %v65
    %vm73 = vcmp.ge.f32.partialorder %v72, 0.0
    %v74 = vsel %vm73, 1.0, 0.9
    %v75 = vmul.f32 %v72, %v74
    %v76 = vld [vmem:[%s4] sm:$0x3]
    %v77 = vld [vmem:[%s4 + $0x2] sm:$0x3]
    %v78 = vld [vmem:[%s5] sm:$0xf]
    %v79 = vld [vmem:[%s6] sm:$0x1]
    %v80 = vld [vmem:[%s6 + $0x1] sm:$0x1]
    %v81 = vld [vmem:[#allocation2] sm:$0xf]
    %v82 = vld [vmem:[#allocation2 + $0x4] sm:$0xf]
    %v83 = vld [vmem:[#allocation2 + $0x8] sm:$0xf]
    %v84 = vld [vmem:[#allocation2 + $0xc] sm:$0xf]
    %v85 = vld [vmem:[#allocation2 + $0x10] sm:$0xf]
    %v86 = vld [vmem:[#allocation2 + $0x14] sm:$0xf]
    %v87 = vld [vmem:[#allocation2 + $0x18] sm:$0xf]
    %v88 = vld [vmem:[#allocation2 + $0x1c] sm:$0xf]
    %v89 = vld [vmem:[#allocation2 + $0x20] sm:$0xf]
    %v90 = vld [vmem:[#allocation2 + $0x24] sm:$0xf]
    %v91 = vld [vmem:[#allocation2 + $0x28] sm:$0xf]
    %v92 = vld [vmem:[#allocation2 + $0x2c] sm:$0xf]
    %v93 = vld [vmem:[#allocation2 + $0x30] sm:$0xf]
    %v94 = vld [vmem:[#allocation2 + $0x34] sm:$0xf]
    %v95 = vld [vmem:[#allocation2 + $0x38] sm:$0xf]
    %v96 = vld [vmem:[#allocation2 + $0x3c] sm:$0xf]
    %v97 = vld [vmem:[#allocation2 + $0x40] sm:$0xf]
    %v98 = vld [vmem:[#allocation2 + $0x44] sm:$0xf]
    %v99 = vld [vmem:[#allocation2 + $0x48] sm:$0xf]
    %v100 = vld [vmem:[#allocation2 + $0x4c] sm:$0xf]
    %v101 = vld [vmem:[#allocation2 + $0x50] sm:$0xf]
    %v102 = vld [vmem:[#allocation2 + $0x54] sm:$0xf]
    %v103 = vld [vmem:[#allocation2 + $0x58] sm:$0xf]
    %v104 = vld [vmem:[#allocation2 + $0x5c] sm:$0xf]
    %v105 = vld [vmem:[#allocation2 + $0x60] sm:$0xf]
    %v106 = vld [vmem:[#allocation2 + $0x64] sm:$0xf]
    %v107 = vld [vmem:[#allocation2 + $0x68] sm:$0xf]
    %v108 = vld [vmem:[#allocation2 + $0x6c] sm:$0xf]
    %v109 = vld [vmem:[#allocation2 + $0x70] sm:$0xf]
    %v110 = vld [vmem:[#allocation2 + $0x74] sm:$0xf]
    %v111 = vld [vmem:[#allocation2 + $0x78] sm:$0xf]
    %v112 = vld [vmem:[#allocation2 + $0x7c] sm:$0xf]
    %v113 = vld [vmem:[%s8] sm:$0x1]
    %v114 = vld [vmem:[%s8 + $0x1] sm:$0x1]
    %v115 = vld [vmem:[%s8 + $0x2] sm:$0x1]
    %v116 = vld [vmem:[%s8 + $0x3] sm:$0x1]
    %v117 = vld [vmem:[%s9] sm:$0xf]
    %v118 = vld [vmem:[%s9 + $0x4] sm:$0xf]
    %v119 = vld [vmem:[%s9 + $0x8] sm:$0xf]
    %v120 = vld [vmem:[%s9 + $0xc] sm:$0xf]
    %v121 = vld [vmem:[%s9 + $0x10] sm:$0xf]
    %v122 = vld [vmem:[%s9 + $0x14] sm:$0xf]
    %v123 = vld [vmem:[%s9 + $0x18] sm:$0xf]
    %v124 = vld [vmem:[%s9 + $0x1c] sm:$0xf]
    %v125 = vld [vmem:[%s9 + $0x20] sm:$0xf]
    %v126 = vld [vmem:[%s9 + $0x24] sm:$0xf]
    %v127 = vld [vmem:[%s9 + $0x28] sm:$0xf]
    %v128 = vld [vmem:[%s9 + $0x2c] sm:$0xf]
    %v129 = vld [vmem:[%s9 + $0x30] sm:$0xf]
    %v130 = vld [vmem:[%s9 + $0x34] sm:$0xf]
    %v131 = vld [vmem:[%s9 + $0x38] sm:$0xf]
    %v132 = vld [vmem:[%s9 + $0x3c] sm:$0xf]
    %v133 = vld [vmem:[%s10] sm:$0x1]
    %v134 = vld [vmem:[%s10 + $0x1] sm:$0x1]
    %v135 = vld [vmem:[%s1] sm:$0xff]
    %v136 = vpack.c.bf16 %v135, %v135
    %vm137 = vcmask 64512
    %v139 = vsel %vm137, %v136, 0
    %vm141 = vcmask 1043456
    %v143 = vsel %vm141, %v78, 0
    %145 = vmatprep.subr.bf16.mxu0 0
    %146 = vmatpush1.bf16.msra.mxu0 0
    %147 = vmatprep.subr.bf16.mxu0 0
    %148 = vmatpush1.bf16.msra.mxu0 0
    %149 = vmatprep.subr.bf16.mxu0 0
    %150 = vmatpush1.bf16.msra.mxu0 0
    %151 = vmatprep.subr.bf16.mxu0 0
    %152 = vmatpush1.bf16.msra.mxu0 0
    %153 = vmatprep.subr.bf16.mxu0 0
    %154 = vmatpush1.bf16.msra.mxu0 0
    %155 = vmatprep.subr.bf16.mxu0 0
    %156 = vmatpush1.bf16.msra.mxu0 0
    %157 = vmatprep.subr.bf16.mxu0 0
    %158 = vmatpush1.bf16.msra.mxu0 0
    %159 = vmatprep.subr.bf16.mxu0 0
    %160 = vmatpush1.bf16.msra.mxu0 %v143
    %161 = vmatprep.subr.bf16.mxu0 0
    %162 = vmatpush2.bf16.msra.mxu0 0
    %163 = vmatprep.subr.bf16.mxu0 0
    %164 = vmatpush2.bf16.msra.mxu0 0
    %165 = vmatprep.subr.bf16.mxu0 0
    %166 = vmatpush2.bf16.msra.mxu0 0
    %167 = vmatprep.subr.bf16.mxu0 0
    %168 = vmatpush2.bf16.msra.mxu0 0
    %169 = vmatprep.subr.bf16.mxu0 0
    %170 = vmatpush2.bf16.msra.mxu0 0
    %171 = vmatprep.subr.bf16.mxu0 0
    %172 = vmatpush2.bf16.msra.mxu0 0
    %173 = vmatprep.subr.bf16.mxu0 0
    %174 = vmatpush2.bf16.msra.mxu0 0
    %175 = vmatprep.subr.bf16.mxu0 0
    %176 = vmatpush2.bf16.msra.mxu0 0
    %177 = vmatprep.mubr.bf16.mxu0 0
    %178 = vmatmul.mubr.bf16.gmra.mxu0 %v139
    %v179 = vpop.f32.mrf.mxu0
    %v180 = vadd.f32 0.0, %v179
    %v181 = vpop.f32.mrf.mxu0
    %v182 = vpop.f32.mrf.mxu0
    %v183 = vpop.f32.mrf.mxu0
    %184 = vdwg.mxu0
    %v185 = vpack.c.bf16 %v75, %v75
    %vm186 = vcmask 31744
    %v188 = vsel %vm186, %v185, 0
    %vm190 = vcmask 1041408
    %v192 = vsel %vm190, %v76, 0
    %194 = vmatprep.subr.bf16.mxu0 0
    %195 = vmatpush1.bf16.msra.mxu0 0
    %196 = vmatprep.subr.bf16.mxu0 0
    %197 = vmatpush1.bf16.msra.mxu0 0
    %198 = vmatprep.subr.bf16.mxu0 0
    %199 = vmatpush1.bf16.msra.mxu0 0
    %200 = vmatprep.subr.bf16.mxu0 0
    %201 = vmatpush1.bf16.msra.mxu0 0
    %202 = vmatprep.subr.bf16.mxu0 0
    %203 = vmatpush1.bf16.msra.mxu0 0
    %204 = vmatprep.subr.bf16.mxu0 0
    %205 = vmatpush1.bf16.msra.mxu0 0
    %206 = vmatprep.subr.bf16.mxu0 0
    %207 = vmatpush1.bf16.msra.mxu0 0
    %208 = vmatprep.subr.bf16.mxu0 0
    %209 = vmatpush1.bf16.msra.mxu0 %v192
    %210 = vmatprep.subr.bf16.mxu0 0
    %211 = vmatpush2.bf16.msra.mxu0 0
    %212 = vmatprep.subr.bf16.mxu0 0
    %213 = vmatpush2.bf16.msra.mxu0 0
    %214 = vmatprep.subr.bf16.mxu0 0
    %215 = vmatpush2.bf16.msra.mxu0 0
    %216 = vmatprep.subr.bf16.mxu0 0
    %217 = vmatpush2.bf16.msra.mxu0 0
    %218 = vmatprep.subr.bf16.mxu0 0
    %219 = vmatpush2.bf16.msra.mxu0 0
    %220 = vmatprep.subr.bf16.mxu0 0
    %221 = vmatpush2.bf16.msra.mxu0 0
    %222 = vmatprep.subr.bf16.mxu0 0
    %223 = vmatpush2.bf16.msra.mxu0 0
    %224 = vmatprep.subr.bf16.mxu0 0
    %225 = vmatpush2.bf16.msra.mxu0 0
    %226 = vmatprep.mubr.bf16.mxu0 0
    %227 = vmatmul.mubr.bf16.gmra.mxu0 %v188
    %v228 = vpop.f32.mrf.mxu0
    %v229 = vadd.f32 %v180, %v228
    %v230 = vpop.f32.mrf.mxu0
    %v231 = vpop.f32.mrf.mxu0
    %v232 = vpop.f32.mrf.mxu0
    %233 = vdwg.mxu0
    %v235 = vlaneseq
    %v236 = vshrl.u32 %v235, 7
    %v237 = vsub.s32 0, %v236
    %v238 = vrot.slane %v79, %v237
    %v240 = vadd.f32 %v229, %v238
    %vm241 = vcmp.ge.f32.partialorder %v240, 0.0
    %v242 = vmul.f32 %v240, 0.01
    %v243 = vsel %vm241, %v240, %v242
    %v244 = vpack.c.bf16 %v243, %v243
    %v246 = vlaneseq
    %v247 = vshrl.u32 %v246, 7
    %v248 = vsub.s32 0, %v247
    %v249 = vrot.slane %v113, %v248
    %v259 = vunpack.c.l.b16 %v81
    %v260 = vunpack.c.l.b16 %v82
    %v261 = vunpack.c.l.b16 %v83
    %v262 = vunpack.c.l.b16 %v84
    %v263 = vunpack.c.l.b16 %v85
    %v264 = vunpack.c.l.b16 %v86
    %v265 = vunpack.c.l.b16 %v87
    %v266 = vunpack.c.l.b16 %v88
    %v267 = vpack.c.b16 %v260, %v259
    %v268 = vpack.c.b16 %v262, %v261
    %v269 = vpack.c.b16 %v264, %v263
    %v270 = vpack.c.b16 %v266, %v265
    %vm275 = vcmask 523264
    %v277 = vsel %vm275, %v244, 0
    %279 = vmatprep.subr.bf16.mxu0 0
    %280 = vmatpush1.bf16.msra.mxu0 0
    %281 = vmatprep.subr.bf16.mxu0 0
    %282 = vmatpush1.bf16.msra.mxu0 0
    %283 = vmatprep.subr.bf16.mxu0 0
    %284 = vmatpush1.bf16.msra.mxu0 0
    %285 = vmatprep.subr.bf16.mxu0 0
    %286 = vmatpush1.bf16.msra.mxu0 0
    %287 = vmatprep.subr.bf16.mxu0 0
    %288 = vmatpush1.bf16.msra.mxu0 %v270
    %289 = vmatprep.subr.bf16.mxu0 0
    %290 = vmatpush1.bf16.msra.mxu0 %v269
    %291 = vmatprep.subr.bf16.mxu0 0
    %292 = vmatpush1.bf16.msra.mxu0 %v268
    %293 = vmatprep.subr.bf16.mxu0 0
    %294 = vmatpush1.bf16.msra.mxu0 %v267
    %295 = vmatprep.subr.bf16.mxu0 0
    %296 = vmatpush2.bf16.msra.mxu0 0
    %297 = vmatprep.subr.bf16.mxu0 0
    %298 = vmatpush2.bf16.msra.mxu0 0
    %299 = vmatprep.subr.bf16.mxu0 0
    %300 = vmatpush2.bf16.msra.mxu0 0
    %301 = vmatprep.subr.bf16.mxu0 0
    %302 = vmatpush2.bf16.msra.mxu0 0
    %303 = vmatprep.subr.bf16.mxu0 0
    %304 = vmatpush2.bf16.msra.mxu0 0
    %305 = vmatprep.subr.bf16.mxu0 0
    %306 = vmatpush2.bf16.msra.mxu0 0
    %307 = vmatprep.subr.bf16.mxu0 0
    %308 = vmatpush2.bf16.msra.mxu0 0
    %309 = vmatprep.subr.bf16.mxu0 0
    %310 = vmatpush2.bf16.msra.mxu0 0
    %311 = vmatprep.mubr.bf16.mxu0 0
    %312 = vmatmul.mubr.bf16.gmra.mxu0 %v277
    %v313 = vpop.f32.mrf.mxu0
    %v314 = vadd.f32 %v249, %v313
    %v315 = vpop.f32.mrf.mxu0
    %v316 = vpop.f32.mrf.mxu0
    %v317 = vpop.f32.mrf.mxu0
    %318 = vdwg.mxu0
    %vm319 = vcmp.ge.f32.partialorder %v314, 0.0
    %v320 = vmul.f32 %v314, 0.01
    %v321 = vsel %vm319, %v314, %v320
    %v322 = vpack.c.bf16 %v321, %v321
    %v324 = vlaneseq
    %v325 = vshrl.u32 %v324, 7
    %v326 = vsub.s32 0, %v325
    %v327 = vrot.slane %v114, %v326
    %v337 = vunpack.c.l.b16 %v89
    %v338 = vunpack.c.l.b16 %v90
    %v339 = vunpack.c.l.b16 %v91
    %v340 = vunpack.c.l.b16 %v92
    %v341 = vunpack.c.l.b16 %v93
    %v342 = vunpack.c.l.b16 %v94
    %v343 = vunpack.c.l.b16 %v95
    %v344 = vunpack.c.l.b16 %v96
    %v345 = vpack.c.b16 %v338, %v337
    %v346 = vpack.c.b16 %v340, %v339
    %v347 = vpack.c.b16 %v342, %v341
    %v348 = vpack.c.b16 %v344, %v343
    %v354 = vsel %vm275, %v322, 0
    %356 = vmatprep.subr.bf16.mxu0 0
    %357 = vmatpush1.bf16.msra.mxu0 0
    %358 = vmatprep.subr.bf16.mxu0 0
    %359 = vmatpush1.bf16.msra.mxu0 0
    %360 = vmatprep.subr.bf16.mxu0 0
    %361 = vmatpush1.bf16.msra.mxu0 0
    %362 = vmatprep.subr.bf16.mxu0 0
    %363 = vmatpush1.bf16.msra.mxu0 0
    %364 = vmatprep.subr.bf16.mxu0 0
    %365 = vmatpush1.bf16.msra.mxu0 %v348
    %366 = vmatprep.subr.bf16.mxu0 0
    %367 = vmatpush1.bf16.msra.mxu0 %v347
    %368 = vmatprep.subr.bf16.mxu0 0
    %369 = vmatpush1.bf16.msra.mxu0 %v346
    %370 = vmatprep.subr.bf16.mxu0 0
    %371 = vmatpush1.bf16.msra.mxu0 %v345
    %372 = vmatprep.subr.bf16.mxu0 0
    %373 = vmatpush2.bf16.msra.mxu0 0
    %374 = vmatprep.subr.bf16.mxu0 0
    %375 = vmatpush2.bf16.msra.mxu0 0
    %376 = vmatprep.subr.bf16.mxu0 0
    %377 = vmatpush2.bf16.msra.mxu0 0
    %378 = vmatprep.subr.bf16.mxu0 0
    %379 = vmatpush2.bf16.msra.mxu0 0
    %380 = vmatprep.subr.bf16.mxu0 0
    %381 = vmatpush2.bf16.msra.mxu0 0
    %382 = vmatprep.subr.bf16.mxu0 0
    %383 = vmatpush2.bf16.msra.mxu0 0
    %384 = vmatprep.subr.bf16.mxu0 0
    %385 = vmatpush2.bf16.msra.mxu0 0
    %386 = vmatprep.subr.bf16.mxu0 0
    %387 = vmatpush2.bf16.msra.mxu0 0
    %388 = vmatprep.mubr.bf16.mxu0 0
    %389 = vmatmul.mubr.bf16.gmra.mxu0 %v354
    %v390 = vpop.f32.mrf.mxu0
    %v391 = vadd.f32 %v327, %v390
    %v392 = vpop.f32.mrf.mxu0
    %v393 = vpop.f32.mrf.mxu0
    %v394 = vpop.f32.mrf.mxu0
    %395 = vdwg.mxu0
    %vm396 = vcmp.ge.f32.partialorder %v391, 0.0
    %v397 = vmul.f32 %v391, 0.01
    %v398 = vsel %vm396, %v391, %v397
    %v399 = vpack.c.bf16 %v398, %v398
    %v401 = vlaneseq
    %v402 = vshrl.u32 %v401, 7
    %v403 = vsub.s32 0, %v402
    %v404 = vrot.slane %v133, %v403
    %v414 = vunpack.c.l.b16 %v117
    %v415 = vunpack.c.l.b16 %v118
    %v416 = vunpack.c.l.b16 %v119
    %v417 = vunpack.c.l.b16 %v120
    %v418 = vunpack.c.l.b16 %v121
    %v419 = vunpack.c.l.b16 %v122
    %v420 = vunpack.c.l.b16 %v123
    %v421 = vunpack.c.l.b16 %v124
    %v422 = vpack.c.b16 %v415, %v414
    %v423 = vpack.c.b16 %v417, %v416
    %v424 = vpack.c.b16 %v419, %v418
    %v425 = vpack.c.b16 %v421, %v420
    %v431 = vsel %vm275, %v399, 0
    %433 = vmatprep.subr.bf16.mxu0 0
    %434 = vmatpush1.bf16.msra.mxu0 0
    %435 = vmatprep.subr.bf16.mxu0 0
    %436 = vmatpush1.bf16.msra.mxu0 0
    %437 = vmatprep.subr.bf16.mxu0 0
    %438 = vmatpush1.bf16.msra.mxu0 0
    %439 = vmatprep.subr.bf16.mxu0 0
    %440 = vmatpush1.bf16.msra.mxu0 0
    %441 = vmatprep.subr.bf16.mxu0 0
    %442 = vmatpush1.bf16.msra.mxu0 %v425
    %443 = vmatprep.subr.bf16.mxu0 0
    %444 = vmatpush1.bf16.msra.mxu0 %v424
    %445 = vmatprep.subr.bf16.mxu0 0
    %446 = vmatpush1.bf16.msra.mxu0 %v423
    %447 = vmatprep.subr.bf16.mxu0 0
    %448 = vmatpush1.bf16.msra.mxu0 %v422
    %449 = vmatprep.subr.bf16.mxu0 0
    %450 = vmatpush2.bf16.msra.mxu0 0
    %451 = vmatprep.subr.bf16.mxu0 0
    %452 = vmatpush2.bf16.msra.mxu0 0
    %453 = vmatprep.subr.bf16.mxu0 0
    %454 = vmatpush2.bf16.msra.mxu0 0
    %455 = vmatprep.subr.bf16.mxu0 0
    %456 = vmatpush2.bf16.msra.mxu0 0
    %457 = vmatprep.subr.bf16.mxu0 0
    %458 = vmatpush2.bf16.msra.mxu0 0
    %459 = vmatprep.subr.bf16.mxu0 0
    %460 = vmatpush2.bf16.msra.mxu0 0
    %461 = vmatprep.subr.bf16.mxu0 0
    %462 = vmatpush2.bf16.msra.mxu0 0
    %463 = vmatprep.subr.bf16.mxu0 0
    %464 = vmatpush2.bf16.msra.mxu0 0
    %465 = vmatprep.mubr.bf16.mxu0 0
    %466 = vmatmul.mubr.bf16.gmra.mxu0 %v431
    %v467 = vpop.f32.mrf.mxu0
    %v468 = vadd.f32 %v404, %v467
    %v469 = vpop.f32.mrf.mxu0
    %v470 = vpop.f32.mrf.mxu0
    %v471 = vpop.f32.mrf.mxu0
    %472 = vdwg.mxu0
    %v473 = vmul.f32 %v468, 1.442695
    %v474 = vpow.pop %v473
    %476 = vrot.lane.b32.xlu0 %v474, 4
    %v477 = vpop.permute.xlu0 %476
    %v479 = vmul.f32 %v75, %v477
    %v480 = vadd.f32 %v479, %v468
    %v481 = vsel %vm186, %v468, 0.0
    %482 = vadd.xlane.f32.xlu0 %v481
    %v483 = vpop.xlane.xlu0 %482
    %v484 = vpack.c.bf16 %v480, %v480
    %486 = vrot.lane.b32.xlu0 %v484, 124
    %v487 = vpop.permute.xlu0 %486
    %489 = vrot.lane.b32.xlu0 %v180, 64
    %v490 = vpop.permute.xlu0 %489
    %v493 = vsel %vm186, %v487, 0
    %v496 = vsel %vm190, %v77, 0
    %498 = vmatprep.subr.bf16.mxu0 0
    %499 = vmatpush1.bf16.msra.mxu0 0
    %500 = vmatprep.subr.bf16.mxu0 0
    %501 = vmatpush1.bf16.msra.mxu0 0
    %502 = vmatprep.subr.bf16.mxu0 0
    %503 = vmatpush1.bf16.msra.mxu0 0
    %504 = vmatprep.subr.bf16.mxu0 0
    %505 = vmatpush1.bf16.msra.mxu0 0
    %506 = vmatprep.subr.bf16.mxu0 0
    %507 = vmatpush1.bf16.msra.mxu0 0
    %508 = vmatprep.subr.bf16.mxu0 0
    %509 = vmatpush1.bf16.msra.mxu0 0
    %510 = vmatprep.subr.bf16.mxu0 0
    %511 = vmatpush1.bf16.msra.mxu0 0
    %512 = vmatprep.subr.bf16.mxu0 0
    %513 = vmatpush1.bf16.msra.mxu0 %v496
    %514 = vmatprep.subr.bf16.mxu0 0
    %515 = vmatpush2.bf16.msra.mxu0 0
    %516 = vmatprep.subr.bf16.mxu0 0
    %517 = vmatpush2.bf16.msra.mxu0 0
    %518 = vmatprep.subr.bf16.mxu0 0
    %519 = vmatpush2.bf16.msra.mxu0 0
    %520 = vmatprep.subr.bf16.mxu0 0
    %521 = vmatpush2.bf16.msra.mxu0 0
    %522 = vmatprep.subr.bf16.mxu0 0
    %523 = vmatpush2.bf16.msra.mxu0 0
    %524 = vmatprep.subr.bf16.mxu0 0
    %525 = vmatpush2.bf16.msra.mxu0 0
    %526 = vmatprep.subr.bf16.mxu0 0
    %527 = vmatpush2.bf16.msra.mxu0 0
    %528 = vmatprep.subr.bf16.mxu0 0
    %529 = vmatpush2.bf16.msra.mxu0 0
    %530 = vmatprep.mubr.bf16.mxu0 0
    %531 = vmatmul.mubr.bf16.gmra.mxu0 %v493
    %v532 = vpop.f32.mrf.mxu0
    %v533 = vadd.f32 %v490, %v532
    %v534 = vpop.f32.mrf.mxu0
    %v535 = vpop.f32.mrf.mxu0
    %v536 = vpop.f32.mrf.mxu0
    %537 = vdwg.mxu0
    %v539 = vlaneseq
    %v540 = vshrl.u32 %v539, 7
    %v541 = vsub.s32 0, %v540
    %v542 = vrot.slane %v80, %v541
    %v544 = vadd.f32 %v533, %v542
    %vm545 = vcmp.ge.f32.partialorder %v544, 0.0
    %v546 = vmul.f32 %v544, 0.01
    %v547 = vsel %vm545, %v544, %v546
    %v548 = vpack.c.bf16 %v547, %v547
    %v550 = vlaneseq
    %v551 = vshrl.u32 %v550, 7
    %v552 = vsub.s32 0, %v551
    %v553 = vrot.slane %v115, %v552
    %v563 = vunpack.c.l.b16 %v97
    %v564 = vunpack.c.l.b16 %v98
    %v565 = vunpack.c.l.b16 %v99
    %v566 = vunpack.c.l.b16 %v100
    %v567 = vunpack.c.l.b16 %v101
    %v568 = vunpack.c.l.b16 %v102
    %v569 = vunpack.c.l.b16 %v103
    %v570 = vunpack.c.l.b16 %v104
    %v571 = vpack.c.b16 %v564, %v563
    %v572 = vpack.c.b16 %v566, %v565
    %v573 = vpack.c.b16 %v568, %v567
    %v574 = vpack.c.b16 %v570, %v569
    %v580 = vsel %vm275, %v548, 0
    %582 = vmatprep.subr.bf16.mxu0 0
    %583 = vmatpush1.bf16.msra.mxu0 0
    %584 = vmatprep.subr.bf16.mxu0 0
    %585 = vmatpush1.bf16.msra.mxu0 0
    %586 = vmatprep.subr.bf16.mxu0 0
    %587 = vmatpush1.bf16.msra.mxu0 0
    %588 = vmatprep.subr.bf16.mxu0 0
    %589 = vmatpush1.bf16.msra.mxu0 0
    %590 = vmatprep.subr.bf16.mxu0 0
    %591 = vmatpush1.bf16.msra.mxu0 %v574
    %592 = vmatprep.subr.bf16.mxu0 0
    %593 = vmatpush1.bf16.msra.mxu0 %v573
    %594 = vmatprep.subr.bf16.mxu0 0
    %595 = vmatpush1.bf16.msra.mxu0 %v572
    %596 = vmatprep.subr.bf16.mxu0 0
    %597 = vmatpush1.bf16.msra.mxu0 %v571
    %598 = vmatprep.subr.bf16.mxu0 0
    %599 = vmatpush2.bf16.msra.mxu0 0
    %600 = vmatprep.subr.bf16.mxu0 0
    %601 = vmatpush2.bf16.msra.mxu0 0
    %602 = vmatprep.subr.bf16.mxu0 0
    %603 = vmatpush2.bf16.msra.mxu0 0
    %604 = vmatprep.subr.bf16.mxu0 0
    %605 = vmatpush2.bf16.msra.mxu0 0
    %606 = vmatprep.subr.bf16.mxu0 0
    %607 = vmatpush2.bf16.msra.mxu0 0
    %608 = vmatprep.subr.bf16.mxu0 0
    %609 = vmatpush2.bf16.msra.mxu0 0
    %610 = vmatprep.subr.bf16.mxu0 0
    %611 = vmatpush2.bf16.msra.mxu0 0
    %612 = vmatprep.subr.bf16.mxu0 0
    %613 = vmatpush2.bf16.msra.mxu0 0
    %614 = vmatprep.mubr.bf16.mxu0 0
    %615 = vmatmul.mubr.bf16.gmra.mxu0 %v580
    %v616 = vpop.f32.mrf.mxu0
    %v617 = vadd.f32 %v553, %v616
    %v618 = vpop.f32.mrf.mxu0
    %v619 = vpop.f32.mrf.mxu0
    %v620 = vpop.f32.mrf.mxu0
    %621 = vdwg.mxu0
    %vm622 = vcmp.ge.f32.partialorder %v617, 0.0
    %v623 = vmul.f32 %v617, 0.01
    %v624 = vsel %vm622, %v617, %v623
    %v625 = vpack.c.bf16 %v624, %v624
    %v627 = vlaneseq
    %v628 = vshrl.u32 %v627, 7
    %v629 = vsub.s32 0, %v628
    %v630 = vrot.slane %v116, %v629
    %v640 = vunpack.c.l.b16 %v105
    %v641 = vunpack.c.l.b16 %v106
    %v642 = vunpack.c.l.b16 %v107
    %v643 = vunpack.c.l.b16 %v108
    %v644 = vunpack.c.l.b16 %v109
    %v645 = vunpack.c.l.b16 %v110
    %v646 = vunpack.c.l.b16 %v111
    %v647 = vunpack.c.l.b16 %v112
    %v648 = vpack.c.b16 %v641, %v640
    %v649 = vpack.c.b16 %v643, %v642
    %v650 = vpack.c.b16 %v645, %v644
    %v651 = vpack.c.b16 %v647, %v646
    %v657 = vsel %vm275, %v625, 0
    %659 = vmatprep.subr.bf16.mxu0 0
    %660 = vmatpush1.bf16.msra.mxu0 0
    %661 = vmatprep.subr.bf16.mxu0 0
    %662 = vmatpush1.bf16.msra.mxu0 0
    %663 = vmatprep.subr.bf16.mxu0 0
    %664 = vmatpush1.bf16.msra.mxu0 0
    %665 = vmatprep.subr.bf16.mxu0 0
    %666 = vmatpush1.bf16.msra.mxu0 0
    %667 = vmatprep.subr.bf16.mxu0 0
    %668 = vmatpush1.bf16.msra.mxu0 %v651
    %669 = vmatprep.subr.bf16.mxu0 0
    %670 = vmatpush1.bf16.msra.mxu0 %v650
    %671 = vmatprep.subr.bf16.mxu0 0
    %672 = vmatpush1.bf16.msra.mxu0 %v649
    %673 = vmatprep.subr.bf16.mxu0 0
    %674 = vmatpush1.bf16.msra.mxu0 %v648
    %675 = vmatprep.subr.bf16.mxu0 0
    %676 = vmatpush2.bf16.msra.mxu0 0
    %677 = vmatprep.subr.bf16.mxu0 0
    %678 = vmatpush2.bf16.msra.mxu0 0
    %679 = vmatprep.subr.bf16.mxu0 0
    %680 = vmatpush2.bf16.msra.mxu0 0
    %681 = vmatprep.subr.bf16.mxu0 0
    %682 = vmatpush2.bf16.msra.mxu0 0
    %683 = vmatprep.subr.bf16.mxu0 0
    %684 = vmatpush2.bf16.msra.mxu0 0
    %685 = vmatprep.subr.bf16.mxu0 0
    %686 = vmatpush2.bf16.msra.mxu0 0
    %687 = vmatprep.subr.bf16.mxu0 0
    %688 = vmatpush2.bf16.msra.mxu0 0
    %689 = vmatprep.subr.bf16.mxu0 0
    %690 = vmatpush2.bf16.msra.mxu0 0
    %691 = vmatprep.mubr.bf16.mxu0 0
    %692 = vmatmul.mubr.bf16.gmra.mxu0 %v657
    %v693 = vpop.f32.mrf.mxu0
    %v694 = vadd.f32 %v630, %v693
    %v695 = vpop.f32.mrf.mxu0
    %v696 = vpop.f32.mrf.mxu0
    %v697 = vpop.f32.mrf.mxu0
    %698 = vdwg.mxu0
    %vm699 = vcmp.ge.f32.partialorder %v694, 0.0
    %v700 = vmul.f32 %v694, 0.01
    %v701 = vsel %vm699, %v694, %v700
    %v702 = vpack.c.bf16 %v701, %v701
    %v704 = vlaneseq
    %v705 = vshrl.u32 %v704, 7
    %v706 = vsub.s32 0, %v705
    %v707 = vrot.slane %v134, %v706
    %v717 = vunpack.c.l.b16 %v125
    %v718 = vunpack.c.l.b16 %v126
    %v719 = vunpack.c.l.b16 %v127
    %v720 = vunpack.c.l.b16 %v128
    %v721 = vunpack.c.l.b16 %v129
    %v722 = vunpack.c.l.b16 %v130
    %v723 = vunpack.c.l.b16 %v131
    %v724 = vunpack.c.l.b16 %v132
    %v725 = vpack.c.b16 %v718, %v717
    %v726 = vpack.c.b16 %v720, %v719
    %v727 = vpack.c.b16 %v722, %v721
    %v728 = vpack.c.b16 %v724, %v723
    %v734 = vsel %vm275, %v702, 0
    %736 = vmatprep.subr.bf16.mxu0 0
    %737 = vmatpush1.bf16.msra.mxu0 0
    %738 = vmatprep.subr.bf16.mxu0 0
    %739 = vmatpush1.bf16.msra.mxu0 0
    %740 = vmatprep.subr.bf16.mxu0 0
    %741 = vmatpush1.bf16.msra.mxu0 0
    %742 = vmatprep.subr.bf16.mxu0 0
    %743 = vmatpush1.bf16.msra.mxu0 0
    %744 = vmatprep.subr.bf16.mxu0 0
    %745 = vmatpush1.bf16.msra.mxu0 %v728
    %746 = vmatprep.subr.bf16.mxu0 0
    %747 = vmatpush1.bf16.msra.mxu0 %v727
    %748 = vmatprep.subr.bf16.mxu0 0
    %749 = vmatpush1.bf16.msra.mxu0 %v726
    %750 = vmatprep.subr.bf16.mxu0 0
    %751 = vmatpush1.bf16.msra.mxu0 %v725
    %752 = vmatprep.subr.bf16.mxu0 0
    %753 = vmatpush2.bf16.msra.mxu0 0
    %754 = vmatprep.subr.bf16.mxu0 0
    %755 = vmatpush2.bf16.msra.mxu0 0
    %756 = vmatprep.subr.bf16.mxu0 0
    %757 = vmatpush2.bf16.msra.mxu0 0
    %758 = vmatprep.subr.bf16.mxu0 0
    %759 = vmatpush2.bf16.msra.mxu0 0
    %760 = vmatprep.subr.bf16.mxu0 0
    %761 = vmatpush2.bf16.msra.mxu0 0
    %762 = vmatprep.subr.bf16.mxu0 0
    %763 = vmatpush2.bf16.msra.mxu0 0
    %764 = vmatprep.subr.bf16.mxu0 0
    %765 = vmatpush2.bf16.msra.mxu0 0
    %766 = vmatprep.subr.bf16.mxu0 0
    %767 = vmatpush2.bf16.msra.mxu0 0
    %768 = vmatprep.mubr.bf16.mxu0 0
    %769 = vmatmul.mubr.bf16.gmra.mxu0 %v734
    %v770 = vpop.f32.mrf.mxu0
    %v771 = vadd.f32 %v707, %v770
    %v772 = vpop.f32.mrf.mxu0
    %v773 = vpop.f32.mrf.mxu0
    %v774 = vpop.f32.mrf.mxu0
    %775 = vdwg.mxu0
    %v776 = vmul.f32 %v771, 1.442695
    %v777 = vpow.pop %v776
    %v778 = vmul.f32 %v75, %v777
    %780 = vrot.lane.b32.xlu0 %v771, 124
    %v781 = vpop.permute.xlu0 %780
    %v783 = vadd.f32 %v778, %v781
    %v784 = vsel %vm186, %v771, 0.0
    %785 = vadd.xlane.f32.xlu0 %v784
    %v786 = vpop.xlane.xlu0 %785
    %v787 = vadd.f32 %v483, %v786
    %789 = vrot.lane.b32.xlu0 %v480, 124
    %v790 = vpop.permute.xlu0 %789
    %793 = vrot.lane.b32.xlu0 %v783, 4
    %v794 = vpop.permute.xlu0 %793
    %v796 = vsel %vm186, %v790, %v794
    %797 = vst.msk [vmem:[#allocation5] sm:$0xff] %vm137, %v796
    %vm798 = vcmask 7168
    %799 = vst.msk [vmem:[%s12] sm:$0xff] %vm798, %v787
    // Predicated region
    $region50: #{tpu_custom_call.1} parent=1 // pred_check
      _
    $region51: #{tpu_custom_call.1} parent=1 // pred_check_branch
      %801 = sbr.rel (0) target = $region53
    $region52: #{tpu_custom_call.1} parent=1 // pred_region
      %s803 = ssub.s32 128, 128
      %804 = vsyncadd [#allocation4], %s803
      %s806 = sshll.u32 [#allocation5], 4
      %s807 = int_to_ptr.vmem [resolvable:$true] %s806
      %809 = dma.vmem_to_hbm [thread:$0]  %s807, 128, %s11, [#allocation4]
    $region53: #{tpu_custom_call.1} parent=1 // pred_fallthru
      _
    // Predicated region
    $region54: #{tpu_custom_call.1} parent=1 // pred_check
      _
    $region55: #{tpu_custom_call.1} parent=1 // pred_check_branch
      %811 = sbr.rel (0) target = $region57
    $region56: #{tpu_custom_call.1} parent=1 // pred_region
      _
    $region57: #{tpu_custom_call.1} parent=1 // pred_fallthru
      _
    // Predicated region
    $region58: #{tpu_custom_call.1} parent=1 // pred_check
      _
    $region59: #{tpu_custom_call.1} parent=1 // pred_check_branch
      %813 = sbr.rel (0) target = $region61
    $region60: #{tpu_custom_call.1} parent=1 // pred_region
      %814 = dma.done [#allocation4], 128
    $region61: #{tpu_custom_call.1} parent=1 // pred_fallthru
      _
    // Predicated region
    $region62: #{tpu_custom_call.1} parent=1 // pred_check
      _
    $region63: #{tpu_custom_call.1} parent=1 // pred_check_branch
      %816 = sbr.rel (0) target = $region65
    $region64: #{tpu_custom_call.1} parent=1 // pred_region
      _
    $region65: #{tpu_custom_call.1} parent=1 // pred_fallthru
      _
    %817 = vsyncpa [#allocation3], 1
    %818 = vsyncpa [#allocation4], 1

</llo_original>
